<compile_context>
chip_gen: v5e
topology: v5e:2x2
jax: 0.10.0
libtpu: 0.0.40
codegen_flags: <defaults>
</compile_context>

<pallas_src>
import functools

import jax
import jax.numpy as jnp
import numpy as np
from jax.experimental import pallas as pl
from jax.experimental.pallas import tpu as pltpu

_LANE = 128


def _round_up(x, m):
    return (x + m - 1) // m * m


def _encoder_kernel(x_ref, w_ref, b_ref, o_ref, acc_ref, *,
                    no_imgnorm: bool, eps: float):
    # x_ref: (tm, tk), w_ref: (tk, embed_p), b_ref: (1, embed_p)
    # acc_ref: (tm, embed_p) f32 scratch, o_ref: (tm, embed_p)
    k = pl.program_id(1)

    @pl.when(k == 0)
    def _():
        acc_ref[...] = jnp.zeros_like(acc_ref)

    acc_ref[...] += jnp.dot(x_ref[...], w_ref[...],
                            preferred_element_type=jnp.float32)

    @pl.when(k == pl.num_programs(1) - 1)
    def _():
        feats = acc_ref[...] + b_ref[...]
        if not no_imgnorm:
            # l2norm along last dim: X / (sqrt(sum(X^2, -1, keepdims)) + eps).
            norm = jnp.sqrt(jnp.sum(feats * feats, axis=-1, keepdims=True)) + eps
            # approx=True lowers to the EUP vrcp (otherwise-idle slot) instead
            # of tm*embed_p VPU divides.
            feats = feats * pl.reciprocal(norm, approx=True)
        o_ref[...] = feats.astype(o_ref.dtype)


def _vmem_config():
    """Generation-aware VMEM budget/limit + multi-TensorCore hint."""
    try:
        cap = int(pltpu.get_tpu_info().vmem_capacity_bytes)
    except Exception:
        cap = 64 * 1024 * 1024  # conservative default (v7x-sized)
    # ~3/4 of physical as the scoped limit, 10 MiB headroom for the budget.
    limit = min(max(cap * 3 // 4, 32 * 1024 * 1024), 112 * 1024 * 1024)
    budget = limit - 10 * 1024 * 1024
    # v7x exposes 64 MiB VMEM per TensorCore and has 2 TCs per chip.
    multi_tc = cap < 100 * 1024 * 1024
    return budget, limit, multi_tc


def _pick_tiles(img_dim_p, embed_p, in_bytes, budget, sublane_mult):
    """Pick (tm, tk). Prefer a VMEM-resident weight; otherwise stream over K."""
    bias_bytes = embed_p * 4

    def largest_tm(w_bytes, tk):
        # Candidates are multiples of 256 where possible (2x256x256 MXU on
        # v6e/v7x); all are multiples of the bf16/int8 packed sublane counts.
        for tm in (2048, 1024, 512, 256, 128, 64, 32, 16, 8):
            need = (w_bytes + bias_bytes
                    + 2 * tm * tk * in_bytes        # x tile, double-buffered
                    + 2 * tm * embed_p * 4          # out tile, double-buffered
                    + 2 * tm * embed_p * 4)         # f32 acc scratch + feats temp
            if need <= budget:
                return tm
        return None

    # Resident weight (single-buffered, grid-invariant block).
    tm_res = largest_tm(img_dim_p * embed_p * in_bytes, img_dim_p)
    if tm_res is not None and tm_res >= 128:
        return tm_res, img_dim_p
    # Stream the weight along a K grid axis (double-buffered (tk, embed_p) blocks).
    for tk in (1024, 512, 256, 128):
        if tk >= img_dim_p:
            continue
        tm_s = largest_tm(2 * tk * embed_p * in_bytes, tk)
        if tm_s is not None and tm_s >= 128:
            return tm_s, tk
    if tm_res is not None:
        return tm_res, img_dim_p
    tk = min(128, img_dim_p)
    # TODO(synk): add an N (embed) grid axis for embed sizes so large that even
    # a (128, embed_p) weight block overflows VMEM.
    return (largest_tm(2 * tk * embed_p * in_bytes, tk) or sublane_mult), tk


def encoder_image_precomp(images, weight_t, bias, *, no_imgnorm=False,
                          eps=1e-8, tm=None, tk=None,
                          compute_dtype=jnp.bfloat16, out_dtype=jnp.float32):
    """images: (..., img_dim); weight_t: (img_dim, embed_size); bias: (embed_size,).

    compute_dtype defaults to bf16 (f32 accumulation in-kernel); pass
    jnp.float32 for bit-closer numerics. out_dtype=jnp.bfloat16 halves output
    writeback bytes when downstream tolerates it.
    """
    img_dim, embed_size = weight_t.shape
    lead_shape = images.shape[:-1]
    x2d = images.reshape(-1, img_dim)
    M = x2d.shape[0]

    in_dtype = jnp.dtype(compute_dtype) if compute_dtype is not None else x2d.dtype
    x2d = x2d.astype(in_dtype)
    weight_t = weight_t.astype(in_dtype)
    in_bytes = in_dtype.itemsize
    # Sub-32-bit dtypes pack rows along sublanes: 16-row multiples for bf16,
    # 32 for int8/fp8.
    sublane_mult = 8 * max(1, 4 // in_bytes)

    budget, vmem_limit, multi_tc = _vmem_config()

    embed_p = _round_up(embed_size, _LANE)
    img_dim_p0 = _round_up(img_dim, _LANE)

    auto_tm = tm is None
    if auto_tm or tk is None:
        tm_pick, tk_pick = _pick_tiles(img_dim_p0, embed_p, in_bytes,
                                       budget, sublane_mult)
        if auto_tm:
            tm = tm_pick
        if tk is None:
            tk = tk_pick

    tk = min(max(_LANE, _round_up(int(tk), _LANE)), img_dim_p0)
    img_dim_p = _round_up(img_dim_p0, tk)
    k_steps = img_dim_p // tk

    m_min = _round_up(max(M, 1), sublane_mult)
    tm = max(sublane_mult, _round_up(int(tm), sublane_mult))
    tm = min(tm, m_min)
    if auto_tm and multi_tc and tm >= m_min and m_min >= 512:
        # v7x has 2 TensorCores: keep at least 2 row-grid steps so the
        # "parallel" axis shards across both cores.
        tm = _round_up((m_min + 1) // 2, 256)
    m_pad = _round_up(max(M, 1), tm)

    # Zero-pad: contraction dim (x cols / W rows) and lane dim (W cols / bias)
    # to 128-multiples, rows to a tile multiple. Zeros keep the math identical
    # and padded rows stay finite under the l2norm (0 * 1/eps = 0).
    if img_dim_p != img_dim:
        x2d = jnp.pad(x2d, ((0, 0), (0, img_dim_p - img_dim)))
        weight_t = jnp.pad(weight_t, ((0, img_dim_p - img_dim), (0, 0)))
    if embed_p != embed_size:
        weight_t = jnp.pad(weight_t, ((0, 0), (0, embed_p - embed_size)))
        bias = jnp.pad(bias, (0, embed_p - embed_size))
    bias2d = bias.astype(jnp.float32).reshape(1, embed_p)
    if m_pad != M:
        x2d = jnp.pad(x2d, ((0, m_pad - M), (0, 0)))

    kernel = functools.partial(_encoder_kernel, no_imgnorm=no_imgnorm, eps=eps)

    if k_steps == 1:
        # Grid-invariant weight block -> single-buffer (one VMEM copy).
        w_spec = pl.BlockSpec((tk, embed_p), lambda i, k: (k, 0),
                              pipeline_mode=pl.Buffered(1))
    else:
        # Streamed over K -> default double-buffering overlaps DMA with MXU.
        w_spec = pl.BlockSpec((tk, embed_p), lambda i, k: (k, 0))

    out = pl.pallas_call(
        kernel,
        out_shape=jax.ShapeDtypeStruct((m_pad, embed_p), out_dtype),
        grid_spec=pltpu.PrefetchScalarGridSpec(
            num_scalar_prefetch=0,
            grid=(m_pad // tm, k_steps),
            in_specs=[
                pl.BlockSpec((tm, tk), lambda i, k: (i, k)),
                w_spec,
                pl.BlockSpec((1, embed_p), lambda i, k: (0, 0),
                             pipeline_mode=pl.Buffered(1)),
            ],
            out_specs=pl.BlockSpec((tm, embed_p), lambda i, k: (i, 0)),
            scratch_shapes=[pltpu.VMEM((tm, embed_p), jnp.float32)],
        ),
        compiler_params=pltpu.CompilerParams(
            dimension_semantics=("parallel", "arbitrary"),
            vmem_limit_bytes=vmem_limit),
    )(x2d, weight_t, bias2d)

    out = out[:M, :embed_size]
    return out.reshape(*lead_shape, embed_size)


def init_params(key, img_dim, embed_size):
    """Xavier-uniform init matching the PyTorch module's init_weights()."""
    r = np.sqrt(6.0) / np.sqrt(img_dim + embed_size)
    # PyTorch weight is (embed_size, img_dim); we keep its transpose.
    weight_t = jax.random.uniform(key, (img_dim, embed_size),
                                  minval=-r, maxval=r, dtype=jnp.float32)
    bias = jnp.zeros((embed_size,), dtype=jnp.float32)
    return weight_t, bias


def _l2norm_ref(x, eps=1e-8):
    norm = jnp.sqrt(jnp.sum(x * x, axis=-1, keepdims=True)) + eps
    return x / norm


if __name__ == "__main__":
    key = jax.random.PRNGKey(0)
    k_img, k_w, k_img2, k_w2, k_img3, k_w3 = jax.random.split(key, 6)

    # Case 1: nice shapes, default bf16 compute path.
    batch, n_regions, img_dim, embed_size = 2, 8, 32, 128
    images = jax.random.normal(k_img, (batch, n_regions, img_dim), dtype=jnp.float32)
    weight_t, bias = init_params(k_w, img_dim, embed_size)

    ref = _l2norm_ref(images @ weight_t + bias)
    out = jax.block_until_ready(encoder_image_precomp(images, weight_t, bias))
    np.testing.assert_allclose(np.asarray(out), np.asarray(ref),
                               rtol=2e-2, atol=2e-2)
    assert out.shape == (batch, n_regions, embed_size)

    # Same shapes, f32 compute path (tolerance allows the approx reciprocal).
    out_f32 = jax.block_until_ready(
        encoder_image_precomp(images, weight_t, bias, compute_dtype=jnp.float32))
    np.testing.assert_allclose(np.asarray(out_f32), np.asarray(ref),
                               rtol=5e-3, atol=5e-3)

    # no_imgnorm path, f32 (exact linear layer, tight check).
    out_nn = jax.block_until_ready(
        encoder_image_precomp(images, weight_t, bias, no_imgnorm=True,
                              compute_dtype=jnp.float32))
    np.testing.assert_allclose(np.asarray(out_nn),
                               np.asarray(images @ weight_t + bias),
                               rtol=1e-5, atol=1e-5)

    # Case 2: awkward shapes (rows not tile-aligned, img_dim/embed not 128-aligned).
    b2, r2, d2, e2 = 3, 5, 48, 96
    images2 = jax.random.normal(k_img2, (b2, r2, d2), dtype=jnp.float32)
    weight_t2, bias2 = init_params(k_w2, d2, e2)
    out2 = jax.block_until_ready(
        encoder_image_precomp(images2, weight_t2, bias2, compute_dtype=jnp.float32))
    ref2 = _l2norm_ref(images2 @ weight_t2 + bias2)
    np.testing.assert_allclose(np.asarray(out2), np.asarray(ref2),
                               rtol=5e-3, atol=5e-3)
    assert out2.shape == (b2, r2, e2)

    # Case 3: force the K-tiled streaming-weight path (accumulator + pl.when).
    b3, d3, e3 = 20, 256, 256
    images3 = jax.random.normal(k_img3, (b3, d3), dtype=jnp.float32)
    weight_t3, bias3 = init_params(k_w3, d3, e3)
    out3 = jax.block_until_ready(
        encoder_image_precomp(images3, weight_t3, bias3, compute_dtype=jnp.float32,
                              tm=16, tk=128))
    ref3 = _l2norm_ref(images3 @ weight_t3 + bias3)
    np.testing.assert_allclose(np.asarray(out3), np.asarray(ref3),
                               rtol=5e-3, atol=5e-3)

    print("KERNEL_OK")
</pallas_src>

<mosaic_0001>
module attributes {stable_mosaic.version = 11 : i64} {
  func.func @_encoder_kernel(%arg0: i32, %arg1: i32, %arg2: memref<16x128xbf16, #tpu.memory_space<vmem>>, %arg3: memref<128x128xbf16, #tpu.memory_space<vmem>>, %arg4: memref<1x128xf32, #tpu.memory_space<vmem>>, %arg5: memref<16x128xf32, #tpu.memory_space<vmem>>, %arg6: memref<16x128xf32, #tpu.memory_space<vmem>>) attributes {dimension_semantics = [#tpu.dimension_semantics<parallel>, #tpu.dimension_semantics<arbitrary>], iteration_bounds = array<i64: 1, 1>, scalar_prefetch = 0 : i64, scratch_operands = 1 : i64, tpu.core_type = #tpu.core_type<tc>, window_params = [{transform_indices = @transform_0, window_bounds = array<i64: 16, 128>}, {pipeline_mode = #tpu.pipeline_mode<synchronous>, transform_indices = @transform_1, window_bounds = array<i64: 128, 128>}, {pipeline_mode = #tpu.pipeline_mode<synchronous>, transform_indices = @transform_2, window_bounds = array<i64: 1, 128>}, {transform_indices = @transform_3, window_bounds = array<i64: 16, 128>}]} {
    %c0_i32 = arith.constant 0 : i32
    %0 = arith.cmpi eq, %arg1, %c0_i32 : i32
    %1 = arith.extui %0 : i1 to i32
    %c0_i32_0 = arith.constant 0 : i32
    %2 = arith.cmpi ne, %1, %c0_i32_0 : i32
    scf.if %2 {
      %cst_10 = arith.constant 0.000000e+00 : f32
      %12 = vector.broadcast %cst_10 : f32 to vector<16x128xf32>
      %c0_11 = arith.constant 0 : index
      %c0_12 = arith.constant 0 : index
      %13 = vector.load %arg6[%c0_11, %c0_12] : memref<16x128xf32, #tpu.memory_space<vmem>>, vector<16x128xf32>
      tpu.vector_store %arg6[%c0_11, %c0_12], %12 {strides = array<i32>} : memref<16x128xf32, #tpu.memory_space<vmem>>, vector<16x128xf32>,
    } else {
    }
    %c0 = arith.constant 0 : index
    %c0_1 = arith.constant 0 : index
    %3 = vector.load %arg6[%c0, %c0_1] : memref<16x128xf32, #tpu.memory_space<vmem>>, vector<16x128xf32>
    %c0_2 = arith.constant 0 : index
    %c0_3 = arith.constant 0 : index
    %4 = vector.load %arg2[%c0_2, %c0_3] : memref<16x128xbf16, #tpu.memory_space<vmem>>, vector<16x128xbf16>
    %c0_4 = arith.constant 0 : index
    %c0_5 = arith.constant 0 : index
    %5 = vector.load %arg3[%c0_4, %c0_5] : memref<128x128xbf16, #tpu.memory_space<vmem>>, vector<128x128xbf16>
    %cst = arith.constant dense<0.000000e+00> : vector<16x128xf32>
    %6 = tpu.matmul %4, %5, %cst {dimension_numbers = #tpu.dot_dimension_numbers<[1], [0], [0], [1], [0, 0, 1, 1], [], []>} : vector<16x128xbf16>, vector<128x128xbf16>, vector<16x128xf32> -> vector<16x128xf32>
    %7 = arith.addf %3, %6 : vector<16x128xf32>
    %c0_6 = arith.constant 0 : index
    %c0_7 = arith.constant 0 : index
    %8 = vector.load %arg6[%c0_6, %c0_7] : memref<16x128xf32, #tpu.memory_space<vmem>>, vector<16x128xf32>
    tpu.vector_store %arg6[%c0_6, %c0_7], %7 {strides = array<i32>} : memref<16x128xf32, #tpu.memory_space<vmem>>, vector<16x128xf32>,
    %c0_i32_8 = arith.constant 0 : i32
    %9 = arith.cmpi eq, %arg1, %c0_i32_8 : i32
    %10 = arith.extui %9 : i1 to i32
    %c0_i32_9 = arith.constant 0 : i32
    %11 = arith.cmpi ne, %10, %c0_i32_9 : i32
    scf.if %11 {
      %c0_10 = arith.constant 0 : index
      %c0_11 = arith.constant 0 : index
      %12 = vector.load %arg6[%c0_10, %c0_11] : memref<16x128xf32, #tpu.memory_space<vmem>>, vector<16x128xf32>
      %c0_12 = arith.constant 0 : index
      %c0_13 = arith.constant 0 : index
      %13 = vector.load %arg4[%c0_12, %c0_13] : memref<1x128xf32, #tpu.memory_space<vmem>>, vector<1x128xf32>
      %14 = vector.broadcast %13 : vector<1x128xf32> to vector<16x128xf32>
      %15 = arith.addf %12, %14 : vector<16x128xf32>
      %16 = arith.mulf %15, %15 : vector<16x128xf32>
      %cst_14 = arith.constant dense<0.000000e+00> : vector<16xf32>
      %17 = vector.multi_reduction <add>, %16, %cst_14 [1] : vector<16x128xf32> to vector<16xf32>
      %18 = vector.shape_cast %17 : vector<16xf32> to vector<16x1xf32>
      %19 = math.sqrt %18 : vector<16x1xf32>
      %cst_15 = arith.constant 9.99999993E-9 : f32
      %20 = vector.broadcast %cst_15 : f32 to vector<16x1xf32>
      %21 = arith.addf %19, %20 : vector<16x1xf32>
      %22 = tpu.reciprocal %21 {approx = true} : vector<16x1xf32> -> vector<16x1xf32>
      %23 = vector.broadcast %22 : vector<16x1xf32> to vector<16x128xf32>
      %24 = arith.mulf %15, %23 : vector<16x128xf32>
      %c0_16 = arith.constant 0 : index
      %c0_17 = arith.constant 0 : index
      %25 = vector.load %arg5[%c0_16, %c0_17] : memref<16x128xf32, #tpu.memory_space<vmem>>, vector<16x128xf32>
      tpu.vector_store %arg5[%c0_16, %c0_17], %24 {strides = array<i32>} : memref<16x128xf32, #tpu.memory_space<vmem>>, vector<16x128xf32>,
    } else {
    }
    return
  }
  func.func @transform_0(%arg0: i32, %arg1: i32) -> (i32, i32) {
    %c0_i32 = arith.constant 0 : i32
    return %arg0, %arg1 : i32, i32
  }
  func.func @transform_1(%arg0: i32, %arg1: i32) -> (i32, i32) {
    %c0_i32 = arith.constant 0 : i32
    %c0_i32_0 = arith.constant 0 : i32
    return %arg1, %c0_i32 : i32, i32
  }
  func.func @transform_2(%arg0: i32, %arg1: i32) -> (i32, i32) {
    %c0_i32 = arith.constant 0 : i32
    %c0_i32_0 = arith.constant 0 : i32
    %c0_i32_1 = arith.constant 0 : i32
    return %c0_i32, %c0_i32_0 : i32, i32
  }
  func.func @transform_3(%arg0: i32, %arg1: i32) -> (i32, i32) {
    %c0_i32 = arith.constant 0 : i32
    %c0_i32_0 = arith.constant 0 : i32
    return %arg0, %c0_i32 : i32, i32
  }
}

</mosaic_0001>

<llo_original>
// kernel: tpu_custom_call.1
$region0: #{tpu_custom_call.1}
  #allocation0 [shape = 'u32[]', space=smem, size = 0x4, offset = 0x4, fixed_abs, tag = 'smem constant byte address 0x4 - core index']
  #allocation1 [shape = 'u32[72,128]{1,0:T(1,128)}', space=vmem, size = 0x9000, scoped, tag = 'internal scratch']
  #allocation2 [shape = 'f32[16,128]{1,0:T(8,128)}', space=vmem, size = 0x2000, scoped, tag = 'scratch operand']
  %s0 = inlined_call_operand.hbm [shape: bf16[16,128], index: 0, kind: input, shape index: {}]
  %s1 = inlined_call_operand.hbm [shape: bf16[128,128], index: 1, kind: input, shape index: {}]
  %s2 = inlined_call_operand.vmem [shape: f32[1,128], index: 2, kind: input, shape index: {}]
  %s3 = inlined_call_operand.hbm [shape: f32[16,128], index: 3, kind: output, shape index: {}]
  %s4 = sld [smem:[#allocation0]]
  $region38: #{tpu_custom_call.1} parent=0
    _
  %s6 = ssub.s32 1, %s4
  %s7 = scalar_select 0, %s6, %s4
  $region1: #{tpu_custom_call.1} parent=0
    #allocation3 [shape = 'u8[4096]{0}', space=vmem, size = 0x1000, scoped, tag = 'input window, operand 0, single buffered']
    #allocation4 [shape = 's32[1]{0}', space=sflag, size = 0x4, scoped, tag = 'scoped memory for tpu_custom_call.1']
    #allocation5 [shape = 's32[1]{0}', space=sflag, size = 0x4, scoped, tag = 'scoped memory for tpu_custom_call.1']
    #allocation6 [shape = 'u8[32768]{0}', space=vmem, size = 0x8000, scoped, tag = 'input window, operand 1, single buffered']
    #allocation7 [shape = 's32[1]{0}', space=sflag, size = 0x4, scoped, tag = 'scoped memory for tpu_custom_call.1']
    #allocation8 [shape = 'u8[8192]{0}', space=vmem, size = 0x2000, scoped, tag = 'output window, operand 0, single buffered']
    %8 = vsyncpa [#allocation4], 0
    %9 = vsyncpa [#allocation7], 0
    %10 = vsyncpa [#allocation5], 0
    // Predicated region
    $region2: #{tpu_custom_call.1} parent=1 // pred_check
      _
    $region3: #{tpu_custom_call.1} parent=1 // pred_check_branch
      %12 = sbr.rel (0) target = $region5
    $region4: #{tpu_custom_call.1} parent=1 // pred_region
      %14 = vsyncadd [#allocation4], 0
      %s15 = sshll.u32 %s0, 4
      %s16 = int_to_ptr.hbm [resolvable:$true] %s15
      %s17 = sshll.u32 [#allocation3], 4
      %s18 = int_to_ptr.vmem [resolvable:$true] %s17
      %23 = dma.hbm_to_vmem [thread:$0]  %s16, 128, %s18, [#allocation4], 64, 64, 4
    $region5: #{tpu_custom_call.1} parent=1 // pred_fallthru
      _
    // Predicated region
    $region6: #{tpu_custom_call.1} parent=1 // pred_check
      _
    $region7: #{tpu_custom_call.1} parent=1 // pred_check_branch
      %25 = sbr.rel (0) target = $region9
    $region8: #{tpu_custom_call.1} parent=1 // pred_region
      %27 = vsyncadd [#allocation7], 0
      %s28 = sshll.u32 %s1, 4
      %s29 = int_to_ptr.hbm [resolvable:$true] %s28
      %s30 = sshll.u32 [#allocation6], 4
      %s31 = int_to_ptr.vmem [resolvable:$true] %s30
      %36 = dma.hbm_to_vmem [thread:$0]  %s29, 1024, %s31, [#allocation7], 64, 64, 4
    $region9: #{tpu_custom_call.1} parent=1 // pred_fallthru
      _
    // Predicated region
    $region10: #{tpu_custom_call.1} parent=1 // pred_check
      _
    $region11: #{tpu_custom_call.1} parent=1 // pred_check_branch
      %38 = sbr.rel (0) target = $region13
    $region12: #{tpu_custom_call.1} parent=1 // pred_region
      _
    $region13: #{tpu_custom_call.1} parent=1 // pred_fallthru
      _
    // Predicated region
    $region14: #{tpu_custom_call.1} parent=1 // pred_check
      _
    $region15: #{tpu_custom_call.1} parent=1 // pred_check_branch
      %40 = sbr.rel (0) target = $region17
    $region16: #{tpu_custom_call.1} parent=1 // pred_region
      %42 = dma.done [#allocation4], 128
    $region17: #{tpu_custom_call.1} parent=1 // pred_fallthru
      _
    // Predicated region
    $region18: #{tpu_custom_call.1} parent=1 // pred_check
      _
    $region19: #{tpu_custom_call.1} parent=1 // pred_check_branch
      %44 = sbr.rel (0) target = $region21
    $region20: #{tpu_custom_call.1} parent=1 // pred_region
      %46 = dma.done [#allocation7], 1024
    $region21: #{tpu_custom_call.1} parent=1 // pred_fallthru
      _
    %p47 = scmp.eq.s32.totalorder 0, 0
    // Predicated region
    $region22: #{tpu_custom_call.1} parent=1 // pred_check
      %p48 = pneg %p47
    $region23: #{tpu_custom_call.1} parent=1 // pred_check_branch
      %50 = sbr.rel (%p48) target = $region25
    $region24: #{tpu_custom_call.1} parent=1 // pred_region
      %51 = vst [vmem:[#allocation2] sm:$0xff] 0.0
      %52 = vst [vmem:[#allocation2 + $0x8] sm:$0xff] 0.0
    $region25: #{tpu_custom_call.1} parent=1 // pred_fallthru
      _
    %v53 = vld [vmem:[#allocation2] sm:$0xff]
    %v54 = vld [vmem:[#allocation2 + $0x8] sm:$0xff]
    %v55 = vld [vmem:[#allocation3] sm:$0xf]
    %v56 = vld [vmem:[#allocation3 + $0x4] sm:$0xf]
    %v57 = vld [vmem:[#allocation6] sm:$0xf]
    %v58 = vld [vmem:[#allocation6 + $0x4] sm:$0xf]
    %v59 = vld [vmem:[#allocation6 + $0x8] sm:$0xf]
    %v60 = vld [vmem:[#allocation6 + $0xc] sm:$0xf]
    %v61 = vld [vmem:[#allocation6 + $0x10] sm:$0xf]
    %v62 = vld [vmem:[#allocation6 + $0x14] sm:$0xf]
    %v63 = vld [vmem:[#allocation6 + $0x18] sm:$0xf]
    %v64 = vld [vmem:[#allocation6 + $0x1c] sm:$0xf]
    %v65 = vld [vmem:[#allocation6 + $0x20] sm:$0xf]
    %v66 = vld [vmem:[#allocation6 + $0x24] sm:$0xf]
    %v67 = vld [vmem:[#allocation6 + $0x28] sm:$0xf]
    %v68 = vld [vmem:[#allocation6 + $0x2c] sm:$0xf]
    %v69 = vld [vmem:[#allocation6 + $0x30] sm:$0xf]
    %v70 = vld [vmem:[#allocation6 + $0x34] sm:$0xf]
    %v71 = vld [vmem:[#allocation6 + $0x38] sm:$0xf]
    %v72 = vld [vmem:[#allocation6 + $0x3c] sm:$0xf]
    %v75 = vunpack.c.l.b16 %v55
    %v76 = vunpack.c.l.b16 %v56
    %v77 = vpack.c.b16 %v76, %v75
    %v95 = vunpack.c.l.b16 %v57
    %v96 = vunpack.c.l.b16 %v58
    %v97 = vunpack.c.l.b16 %v59
    %v98 = vunpack.c.l.b16 %v60
    %v99 = vunpack.c.l.b16 %v61
    %v100 = vunpack.c.l.b16 %v62
    %v101 = vunpack.c.l.b16 %v63
    %v102 = vunpack.c.l.b16 %v64
    %v103 = vunpack.c.l.b16 %v65
    %v104 = vunpack.c.l.b16 %v66
    %v105 = vunpack.c.l.b16 %v67
    %v106 = vunpack.c.l.b16 %v68
    %v107 = vunpack.c.l.b16 %v69
    %v108 = vunpack.c.l.b16 %v70
    %v109 = vunpack.c.l.b16 %v71
    %v110 = vunpack.c.l.b16 %v72
    %v111 = vpack.c.b16 %v96, %v95
    %v112 = vpack.c.b16 %v98, %v97
    %v113 = vpack.c.b16 %v100, %v99
    %v114 = vpack.c.b16 %v102, %v101
    %v115 = vpack.c.b16 %v104, %v103
    %v116 = vpack.c.b16 %v106, %v105
    %v117 = vpack.c.b16 %v108, %v107
    %v118 = vpack.c.b16 %v110, %v109
    %127 = vmatpush.bf16.msra.mxu0 %v118
    %128 = vmatpush.bf16.msra.mxu0 %v117
    %129 = vmatpush.bf16.msra.mxu0 %v116
    %130 = vmatpush.bf16.msra.mxu0 %v115
    %131 = vmatpush.bf16.msra.mxu0 %v114
    %132 = vmatpush.bf16.msra.mxu0 %v113
    %133 = vmatpush.bf16.msra.mxu0 %v112
    %134 = vmatpush.bf16.msra.mxu0 %v111
    %135 = vmatmul.bf16.gmra.mxu0 %v77
    %v136 = vpop.f32.mrf.mxu0
    %v137 = vadd.f32 0.0, %v136
    %v138 = vpop.f32.mrf.mxu0
    %v139 = vadd.f32 0.0, %v138
    %140 = vdwg.mxu0
    %v141 = vadd.f32 %v53, %v137
    %v142 = vadd.f32 %v54, %v139
    %143 = vst [vmem:[#allocation2] sm:$0xff] %v141
    %144 = vst [vmem:[#allocation2 + $0x8] sm:$0xff] %v142
    // Predicated region
    $region26: #{tpu_custom_call.1} parent=1 // pred_check
      %p145 = pneg %p47
    $region27: #{tpu_custom_call.1} parent=1 // pred_check_branch
      %147 = sbr.rel (%p145) target = $region29
    $region28: #{tpu_custom_call.1} parent=1 // pred_region
      %v148 = vld [vmem:[#allocation2] sm:$0xff]
      %v149 = vld [vmem:[#allocation2 + $0x8] sm:$0xff]
      %v150 = vld [vmem:[%s2] sm:$0x1]
      %v152 = vperm.slane %v150, 0
      %v154 = vadd.f32 %v148, %v152
      %v155 = vadd.f32 %v149, %v152
      %v156 = vmul.f32 %v154, %v154
      %v157 = vmul.f32 %v155, %v155
      %158 = vadd.xlane.f32.xlu0 %v156
      %v159 = vpop.xlane.xlu0 %158
      %160 = vadd.xlane.f32.xlu0 %v157
      %v161 = vpop.xlane.xlu0 %160
      %v162 = vrsqrt.pop %v159
      %v163 = vmul.f32 %v162, %v159
      %v164 = vmul.f32 %v163, %v162
      %v165 = vmul.f32 0.5, %v164
      %v166 = vsub.f32 1.5, %v165
      %v167 = vmul.f32 %v162, %v166
      %v168 = vmul.f32 %v159, %v167
      %vm169 = vcmp.eq.f32.partialorder %v159, inf
      %v170 = vsel %vm169, %v159, %v168
      %vm171 = vcmp.eq.f32.partialorder %v159, 0.0
      %v172 = vand.u32 %v159, 2147483648
      %v173 = vsel %vm171, %v172, %v170
      %v174 = vrsqrt.pop %v161
      %v175 = vmul.f32 %v174, %v161
      %v176 = vmul.f32 %v175, %v174
      %v177 = vmul.f32 0.5, %v176
      %v178 = vsub.f32 1.5, %v177
      %v179 = vmul.f32 %v174, %v178
      %v180 = vmul.f32 %v161, %v179
      %vm181 = vcmp.eq.f32.partialorder %v161, inf
      %v182 = vsel %vm181, %v161, %v180
      %vm183 = vcmp.eq.f32.partialorder %v161, 0.0
      %v184 = vand.u32 %v161, 2147483648
      %v185 = vsel %vm183, %v184, %v182
      %v186 = vadd.f32 %v173, 1e-08
      %v187 = vadd.f32 %v185, 1e-08
      %v188 = vrcp.pop %v186
      %v189 = vrcp.pop %v187
      %v190 = vmul.f32 %v154, %v188
      %v191 = vmul.f32 %v155, %v189
      %192 = vst [vmem:[#allocation8] sm:$0xff] %v190
      %193 = vst [vmem:[#allocation8 + $0x8] sm:$0xff] %v191
    $region29: #{tpu_custom_call.1} parent=1 // pred_fallthru
      _
    // Predicated region
    $region30: #{tpu_custom_call.1} parent=1 // pred_check
      _
    $region31: #{tpu_custom_call.1} parent=1 // pred_check_branch
      %195 = sbr.rel (0) target = $region33
    $region32: #{tpu_custom_call.1} parent=1 // pred_region
      %197 = vsyncadd [#allocation5], 0
      %s198 = sshll.u32 [#allocation8], 4
      %s199 = int_to_ptr.vmem [resolvable:$true] %s198
      %s200 = sshll.u32 %s3, 4
      %s201 = int_to_ptr.hbm [resolvable:$true] %s200
      %206 = dma.vmem_to_hbm [thread:$0]  %s199, 256, %s201, [#allocation5], 128, 128, 8
    $region33: #{tpu_custom_call.1} parent=1 // pred_fallthru
      _
    // Predicated region
    $region34: #{tpu_custom_call.1} parent=1 // pred_check
      _
    $region35: #{tpu_custom_call.1} parent=1 // pred_check_branch
      %208 = sbr.rel (0) target = $region37
    $region36: #{tpu_custom_call.1} parent=1 // pred_region
      %210 = dma.done [#allocation5], 256
    $region37: #{tpu_custom_call.1} parent=1 // pred_fallthru
      _
    %211 = vsyncpa [#allocation4], 1
    %212 = vsyncpa [#allocation7], 1
    %213 = vsyncpa [#allocation5], 1

</llo_original>
